<compile_context>
chip_gen: v7x
topology: tpu7x:2x2x1
jax: 0.10.0
libtpu: 0.0.40
codegen_flags: <defaults>
</compile_context>

<pallas_src>
import functools

import numpy as np
import jax
import jax.numpy as jnp
from jax import lax
from jax.experimental import pallas as pl
from jax.experimental.pallas import tpu as pltpu

LEAKY_SLOPE = 0.01   # nn.LeakyReLU default
BN_EPS = 1e-5        # nn.BatchNorm2d default

ENCODER_CFG = [
    ('conv', 'leaky', 1, 32, 3, 1, 2),
    ('convlstm', '', 32, 32, 3, 1, 1),
    ('conv', 'leaky', 32, 64, 3, 1, 2),
    ('convlstm', '', 64, 64, 3, 1, 1),
    ('conv', 'leaky', 64, 128, 3, 1, 2),
    ('convlstm', '', 128, 128, 3, 1, 1),
]


def _round_up(x, m):
    return ((x + m - 1) // m) * m


# ---------------------------------------------------------------------------
# Conv2d (no bias) + folded BatchNorm + optional LeakyReLU
# One fused matmul per grid step: (bm, Kp) @ (Kp, Cp), BN scale pre-folded into W,
# Cout padded to a multiple of 128 so the store is lane-dense.
# ---------------------------------------------------------------------------
def _conv_bn_act_kernel(x_ref, w_ref, bias_ref, o_ref, *, act):
    y = jnp.dot(x_ref[...], w_ref[...], preferred_element_type=jnp.float32)
    y = y + bias_ref[...]
    if act == 'leaky':
        y = jnp.where(y > 0, y, LEAKY_SLOPE * y)
    o_ref[...] = y.astype(o_ref.dtype)


def conv_bn_act(x_nhwc, weight, bn_gamma, bn_beta, *, kernel_size, padding,
                stride, act):
    """x_nhwc: (N, H, W, Cin); weight: torch layout (Cout, Cin, k, k)."""
    N, H, W, Cin = x_nhwc.shape
    Cout = weight.shape[0]
    k = kernel_size
    Ho = (H + 2 * padding - k) // stride + 1
    Wo = (W + 2 * padding - k) // stride + 1
    K = k * k * Cin
    M = N * Ho * Wo

    # im2col in the fused (M, k*k*Cin) layout (tap-major, channel-minor).
    xp = jnp.pad(x_nhwc, ((0, 0), (padding, padding), (padding, padding), (0, 0)))
    cols = []
    for i in range(k):
        for j in range(k):
            t = lax.slice(
                xp, (0, i, j, 0),
                (N, i + stride * (Ho - 1) + 1, j + stride * (Wo - 1) + 1, Cin),
                (1, stride, stride, 1))
            cols.append(t)                                   # (N, Ho, Wo, Cin)
    x_col = jnp.concatenate(cols, axis=-1).reshape(M, K)

    # weight -> (k*k*Cin, Cout), same (tap, channel) ordering as x_col;
    # fold BN scale (running stats are fresh: mean=0, var=1) into the columns.
    scale = bn_gamma / jnp.sqrt(1.0 + BN_EPS)                # (Cout,)
    w_mat = jnp.transpose(weight, (2, 3, 1, 0)).reshape(K, Cout) * scale
    bias = bn_beta.reshape(1, Cout)

    # Pad tiny contractions (layer 0: K=9) so the LHS tile fills the MXU lanes.
    Kp = 128 if K < 128 else K
    if Kp != K:
        x_col = jnp.pad(x_col, ((0, 0), (0, Kp - K)))
        w_mat = jnp.pad(w_mat, ((0, Kp - K), (0, 0)))

    # Pad Cout to a multiple of 128 -> lane-dense output stores (no vst.msk).
    Cp = _round_up(Cout, 128)
    if Cp != Cout:
        w_mat = jnp.pad(w_mat, ((0, 0), (0, Cp - Cout)))
        bias = jnp.pad(bias, ((0, 0), (0, Cp - Cout)))

    # Block the fused M = N*Ho*Wo rows; single grid step at the test sizes.
    bm = min(512, _round_up(M, 8))
    Mp = _round_up(M, bm)
    if Mp != M:
        x_col = jnp.pad(x_col, ((0, Mp - M), (0, 0)))

    # TODO(synk): at larger resolutions the im2col could move inside the kernel to
    # avoid the 9x x_col inflation in HBM; at these sizes it is launch-bound anyway.
    out = pl.pallas_call(
        functools.partial(_conv_bn_act_kernel, act=act),
        out_shape=jax.ShapeDtypeStruct((Mp, Cp), jnp.float32),
        grid=(Mp // bm,),
        in_specs=[
            pl.BlockSpec((bm, Kp), lambda i: (i, 0)),
            pl.BlockSpec((Kp, Cp), lambda i: (0, 0)),
            pl.BlockSpec((1, Cp), lambda i: (0, 0)),
        ],
        out_specs=pl.BlockSpec((bm, Cp), lambda i: (i, 0)),
        compiler_params=pltpu.CompilerParams(dimension_semantics=("parallel",)),
    )(x_col, w_mat, bias)
    return out[:M, :Cout].reshape(N, Ho, Wo, Cout)


# ---------------------------------------------------------------------------
# ConvLSTMBlock: full recurrence in one Pallas kernel.
# grid = (B, S): batch axis "parallel" (independent recurrences, shards across
# TensorCores), time axis "arbitrary" (sequential carry in VMEM scratch).
# ---------------------------------------------------------------------------
def _convlstm_kernel(x_ref, wx_ref, wh_ref, bias_ref, o_ref, hpad_ref, c_ref,
                     *, k, H, W, nf, pad):
    # x_ref:    (1, 1, M, k*k*Cx)   im2col'ed input frame (M = H*W, one batch item)
    # wx_ref:   (k*k*Cx, 4*nf)      input->gates weights (BN scale folded in)
    # wh_ref:   (k*k*nf, 4*nf)      hidden->gates weights (BN scale folded in)
    # bias_ref: (1, 4*nf)           folded BatchNorm bias
    # o_ref:    (1, 1, M, nf)
    # hpad_ref: VMEM (Hp, Wp, nf)   zero-padded hidden state (carried over t)
    # c_ref:    VMEM (M, nf)        cell state (carried over t)
    # Gate packing is (i, f, o | c) so one contiguous sigmoid covers all three
    # sigmoid gates and the cell gate is sliced from the tail.
    t = pl.program_id(1)

    @pl.when(t == 0)
    def _():
        hpad_ref[...] = jnp.zeros_like(hpad_ref)
        c_ref[...] = jnp.zeros_like(c_ref)

    M = H * W

    # input -> gates: single matmul, K = k*k*Cx, N = 4*nf.
    gates = jnp.dot(x_ref[0, 0], wx_ref[...], preferred_element_type=jnp.float32)

    # hidden -> gates: in-kernel im2col into one lane-dense (M, 9*nf) slab,
    # then a single matmul with K = 9*nf.
    h = hpad_ref[...]                                        # (Hp, Wp, nf)
    taps = [h[i:i + H, j:j + W, :] for i in range(k) for j in range(k)]
    h_col = jnp.concatenate(taps, axis=-1).reshape(M, k * k * nf)
    gates = gates + jnp.dot(h_col, wh_ref[...], preferred_element_type=jnp.float32)

    gates = gates + bias_ref[...]                            # (M, 4*nf), lane-dense

    sig = jax.nn.sigmoid(gates[:, :3 * nf])                  # i, f, o in one EUP slab
    ingate = sig[:, :nf]
    forgetgate = sig[:, nf:2 * nf]
    outgate = sig[:, 2 * nf:3 * nf]
    cellgate = gates[:, 3 * nf:]                             # reference: NO tanh here

    cy = forgetgate * c_ref[...] + ingate * cellgate
    hy = outgate * jnp.tanh(cy)

    c_ref[...] = cy
    hpad_ref[pad:pad + H, pad:pad + W, :] = hy.reshape(H, W, nf)
    o_ref[0, 0] = hy.astype(o_ref.dtype)


def convlstm(x_bshwc, weight, bn_gamma, bn_beta, *, num_features,
             kernel_size=3, padding=1, stride=1):
    """x_bshwc: (B, S, H, W, Cx); weight: torch layout (4*nf, Cx+nf, k, k)."""
    assert kernel_size == 3 and padding == 1 and stride == 1
    B, S, H, W, Cx = x_bshwc.shape
    nf = num_features
    k = kernel_size
    Hp, Wp = H + 2 * padding, W + 2 * padding
    Mb = H * W
    Kx = k * k * Cx

    # im2col of the input directly in (B, S, Mb, Kx) order (no wrapper transpose),
    # tap-major / channel-minor to match the weight reshape below.
    xp = jnp.pad(x_bshwc,
                 ((0, 0), (0, 0), (padding, padding), (padding, padding), (0, 0)))
    cols = [xp[:, :, i:i + H, j:j + W, :] for i in range(k) for j in range(k)]
    x_col = jnp.concatenate(cols, axis=-1).reshape(B, S, Mb, Kx)

    # torch weight (4nf, Cx+nf, k, k) -> (k, k, Cx+nf, 4nf); reorder the gate
    # columns from (i, f, c, o) to (i, f, o, c) and fold the BN scale in.
    gate_perm = np.concatenate([np.arange(0, nf), np.arange(nf, 2 * nf),
                                np.arange(3 * nf, 4 * nf), np.arange(2 * nf, 3 * nf)])
    scale = (bn_gamma / jnp.sqrt(1.0 + BN_EPS))[gate_perm]   # (4nf,)
    bias = bn_beta[gate_perm].reshape(1, 4 * nf)

    wt = jnp.transpose(weight, (2, 3, 1, 0))[..., gate_perm] * scale  # (k,k,Cx+nf,4nf)
    wx = wt[:, :, :Cx, :].reshape(Kx, 4 * nf)                # (k*k*Cx, 4nf)
    wh = wt[:, :, Cx:, :].reshape(k * k * nf, 4 * nf)        # (k*k*nf, 4nf)

    out = pl.pallas_call(
        functools.partial(_convlstm_kernel, k=k, H=H, W=W, nf=nf, pad=padding),
        out_shape=jax.ShapeDtypeStruct((B, S, Mb, nf), jnp.float32),
        grid=(B, S),
        in_specs=[
            pl.BlockSpec((1, 1, Mb, Kx), lambda b, t: (b, t, 0, 0)),
            pl.BlockSpec((Kx, 4 * nf), lambda b, t: (0, 0)),
            pl.BlockSpec((k * k * nf, 4 * nf), lambda b, t: (0, 0)),
            pl.BlockSpec((1, 4 * nf), lambda b, t: (0, 0)),
        ],
        out_specs=pl.BlockSpec((1, 1, Mb, nf), lambda b, t: (b, t, 0, 0)),
        scratch_shapes=[
            pltpu.VMEM((Hp, Wp, nf), jnp.float32),   # padded hidden state (per core)
            pltpu.VMEM((Mb, nf), jnp.float32),       # cell state (per core)
        ],
        compiler_params=pltpu.CompilerParams(
            dimension_semantics=("parallel", "arbitrary")),  # batch || , time seq
    )(x_col, wx, wh, bias)
    return out.reshape(B, S, H, W, nf)                       # pure view reshape


# ---------------------------------------------------------------------------
# Encoder wrapper (parameter init + forward)
# ---------------------------------------------------------------------------
def init_encoder_params(key):
    params = {}
    for idx, (typ, _act, cin, cout, k, _pad, _stride) in enumerate(ENCODER_CFG):
        key, kw, kg = jax.random.split(key, 3)
        if typ == 'conv':
            wshape = (cout, cin, k, k)
            nbn = cout
        else:  # convlstm: conv(in=cin+nf, out=4*nf), bias=False
            wshape = (4 * cout, cin + cout, k, k)
            nbn = 4 * cout
        params[f'{typ}_{idx}'] = dict(
            w=0.01 * jax.random.normal(kw, wshape, jnp.float32),             # std=0.01
            gamma=1.0 + 0.02 * jax.random.normal(kg, (nbn,), jnp.float32),   # std=0.02
            beta=jnp.zeros((nbn,), jnp.float32),
        )
    return params


def encoder_forward(params, x_bschw):
    """x_bschw: (B, S, C, H, W) float32 -> list of (B, S, C', H', W') arrays."""
    outputs = [x_bschw]
    x = jnp.transpose(x_bschw, (0, 1, 3, 4, 2))   # -> (B, S, H, W, C)
    for idx, (typ, act, _cin, cout, k, pad, stride) in enumerate(ENCODER_CFG):
        p = params[f'{typ}_{idx}']
        if typ == 'conv':
            B, S, H, W, C = x.shape
            xf = x.reshape(B * S, H, W, C)
            xf = conv_bn_act(xf, p['w'], p['gamma'], p['beta'],
                             kernel_size=k, padding=pad, stride=stride, act=act)
            x = xf.reshape(B, S, xf.shape[1], xf.shape[2], xf.shape[3])
        else:  # convlstm
            x = convlstm(x, p['w'], p['gamma'], p['beta'],
                         num_features=cout, kernel_size=k, padding=pad,
                         stride=stride)
            outputs.append(jnp.transpose(x, (0, 1, 4, 2, 3)))  # back to (B,S,C,H,W)
    return outputs


if __name__ == "__main__":
    key = jax.random.PRNGKey(0)
    pkey, xkey = jax.random.split(key)
    params = init_encoder_params(pkey)

    B, S, C, H, W = 2, 4, 1, 16, 16
    x = jax.random.normal(xkey, (B, S, C, H, W), jnp.float32)

    outs = encoder_forward(params, x)
    outs = jax.block_until_ready(outs)

    # sanity: expected shapes and finite values
    assert outs[0].shape == (B, S, 1, 16, 16)
    assert outs[1].shape == (B, S, 32, 8, 8)
    assert outs[2].shape == (B, S, 64, 4, 4)
    assert outs[3].shape == (B, S, 128, 2, 2)
    assert all(bool(jnp.isfinite(o).all()) for o in outs)

    print("KERNEL_OK")
</pallas_src>

<mosaic_0001>
module attributes {stable_mosaic.version = 11 : i64} {
  func.func @_conv_bn_act_kernel(%arg0: i32, %arg1: memref<512x128xf32, #tpu.memory_space<vmem>>, %arg2: memref<128x128xf32, #tpu.memory_space<vmem>>, %arg3: memref<1x128xf32, #tpu.memory_space<vmem>>, %arg4: memref<512x128xf32, #tpu.memory_space<vmem>>) attributes {dimension_semantics = [#tpu.dimension_semantics<parallel>], iteration_bounds = array<i64: 1>, scalar_prefetch = 0 : i64, scratch_operands = 0 : i64, tpu.core_type = #tpu.core_type<tc>, window_params = [{transform_indices = @transform_0, window_bounds = array<i64: 512, 128>}, {pipeline_mode = #tpu.pipeline_mode<synchronous>, transform_indices = @transform_1, window_bounds = array<i64: 128, 128>}, {pipeline_mode = #tpu.pipeline_mode<synchronous>, transform_indices = @transform_2, window_bounds = array<i64: 1, 128>}, {transform_indices = @transform_3, window_bounds = array<i64: 512, 128>}]} {
    %c0 = arith.constant 0 : index
    %c0_0 = arith.constant 0 : index
    %0 = vector.load %arg1[%c0, %c0_0] : memref<512x128xf32, #tpu.memory_space<vmem>>, vector<512x128xf32>
    %c0_1 = arith.constant 0 : index
    %c0_2 = arith.constant 0 : index
    %1 = vector.load %arg2[%c0_1, %c0_2] : memref<128x128xf32, #tpu.memory_space<vmem>>, vector<128x128xf32>
    %cst = arith.constant dense<0.000000e+00> : vector<512x128xf32>
    %2 = tpu.matmul %0, %1, %cst {dimension_numbers = #tpu.dot_dimension_numbers<[1], [0], [0], [1], [0, 0, 1, 1], [], []>} : vector<512x128xf32>, vector<128x128xf32>, vector<512x128xf32> -> vector<512x128xf32>
    %c0_3 = arith.constant 0 : index
    %c0_4 = arith.constant 0 : index
    %3 = vector.load %arg3[%c0_3, %c0_4] : memref<1x128xf32, #tpu.memory_space<vmem>>, vector<1x128xf32>
    %4 = vector.broadcast %3 : vector<1x128xf32> to vector<512x128xf32>
    %5 = arith.addf %2, %4 : vector<512x128xf32>
    %cst_5 = arith.constant 0.000000e+00 : f32
    %6 = vector.broadcast %cst_5 : f32 to vector<512x128xf32>
    %7 = arith.cmpf ogt, %5, %6 : vector<512x128xf32>
    %cst_6 = arith.constant 0.00999999977 : f32
    %8 = vector.broadcast %cst_6 : f32 to vector<512x128xf32>
    %9 = arith.mulf %8, %5 : vector<512x128xf32>
    %10 = arith.select %7, %5, %9 : vector<512x128xi1>, vector<512x128xf32>
    %c0_7 = arith.constant 0 : index
    %c0_8 = arith.constant 0 : index
    %11 = vector.load %arg4[%c0_7, %c0_8] : memref<512x128xf32, #tpu.memory_space<vmem>>, vector<512x128xf32>
    tpu.vector_store %arg4[%c0_7, %c0_8], %10 {strides = array<i32>} : memref<512x128xf32, #tpu.memory_space<vmem>>, vector<512x128xf32>,
    return
  }
  func.func @transform_0(%arg0: i32) -> (i32, i32) {
    %c0_i32 = arith.constant 0 : i32
    %c0_i32_0 = arith.constant 0 : i32
    return %arg0, %c0_i32 : i32, i32
  }
  func.func @transform_1(%arg0: i32) -> (i32, i32) {
    %c0_i32 = arith.constant 0 : i32
    %c0_i32_0 = arith.constant 0 : i32
    %c0_i32_1 = arith.constant 0 : i32
    return %c0_i32, %c0_i32_0 : i32, i32
  }
  func.func @transform_2(%arg0: i32) -> (i32, i32) {
    %c0_i32 = arith.constant 0 : i32
    %c0_i32_0 = arith.constant 0 : i32
    %c0_i32_1 = arith.constant 0 : i32
    return %c0_i32, %c0_i32_0 : i32, i32
  }
  func.func @transform_3(%arg0: i32) -> (i32, i32) {
    %c0_i32 = arith.constant 0 : i32
    %c0_i32_0 = arith.constant 0 : i32
    return %arg0, %c0_i32 : i32, i32
  }
}

</mosaic_0001>

<llo_original>
// kernel: tpu_custom_call.1
$region0: #{tpu_custom_call.1}
  #allocation0 [shape = 'u32[]', space=smem, size = 0x4, offset = 0x4, fixed_abs, tag = 'smem constant byte address 0x4 - core index']
  #allocation1 [shape = 'u32[144,128]{1,0:T(1,128)}', space=vmem, size = 0x12000, scoped, tag = 'internal scratch']
  %s0 = inlined_call_operand.hbm [shape: f32[512,128], index: 0, kind: input, shape index: {}]
  %s1 = inlined_call_operand.hbm [shape: f32[128,128], index: 1, kind: input, shape index: {}]
  %s2 = inlined_call_operand.vmem [shape: f32[1,128], index: 2, kind: input, shape index: {}]
  %s3 = inlined_call_operand.hbm [shape: f32[512,128], index: 3, kind: output, shape index: {}]
  %s4 = sld [smem:[#allocation0]]
  $region30: #{tpu_custom_call.1} parent=0
    _
  %s6 = ssub.s32 1, %s4
  %s7 = scalar_select 0, %s6, %s4
  $region1: #{tpu_custom_call.1} parent=0
    #allocation2 [shape = 'u8[262144]{0}', space=vmem, size = 0x40000, scoped, tag = 'input window, operand 0, single buffered']
    #allocation3 [shape = 's32[1]{0}', space=sflag, size = 0x4, scoped, tag = 'scoped memory for tpu_custom_call.1']
    #allocation4 [shape = 's32[1]{0}', space=sflag, size = 0x4, scoped, tag = 'scoped memory for tpu_custom_call.1']
    #allocation5 [shape = 'u8[65536]{0}', space=vmem, size = 0x10000, scoped, tag = 'input window, operand 1, single buffered']
    #allocation6 [shape = 's32[1]{0}', space=sflag, size = 0x4, scoped, tag = 'scoped memory for tpu_custom_call.1']
    #allocation7 [shape = 'u8[262144]{0}', space=vmem, size = 0x40000, scoped, tag = 'output window, operand 0, single buffered']
    %8 = vsyncpa [#allocation3], 0
    %9 = vsyncpa [#allocation6], 0
    %10 = vsyncpa [#allocation4], 0
    // Predicated region
    $region2: #{tpu_custom_call.1} parent=1 // pred_check
      _
    $region3: #{tpu_custom_call.1} parent=1 // pred_check_branch
      %12 = sbr.rel (0) target = $region5
    $region4: #{tpu_custom_call.1} parent=1 // pred_region
      %s14 = ssub.s32 8192, 8192
      %15 = vsyncadd [#allocation3], %s14
      %s16 = sshll.u32 [#allocation2], 4
      %s17 = int_to_ptr.vmem [resolvable:$true] %s16
      %22 = dma.hbm_to_vmem [thread:$0]  %s0, 8192, %s17, [#allocation3], 128, 128, 8
    $region5: #{tpu_custom_call.1} parent=1 // pred_fallthru
      _
    // Predicated region
    $region6: #{tpu_custom_call.1} parent=1 // pred_check
      _
    $region7: #{tpu_custom_call.1} parent=1 // pred_check_branch
      %24 = sbr.rel (0) target = $region9
    $region8: #{tpu_custom_call.1} parent=1 // pred_region
      %s26 = ssub.s32 2048, 2048
      %27 = vsyncadd [#allocation6], %s26
      %s28 = sshll.u32 [#allocation5], 4
      %s29 = int_to_ptr.vmem [resolvable:$true] %s28
      %34 = dma.hbm_to_vmem [thread:$0]  %s1, 2048, %s29, [#allocation6], 128, 128, 8
    $region9: #{tpu_custom_call.1} parent=1 // pred_fallthru
      _
    // Predicated region
    $region10: #{tpu_custom_call.1} parent=1 // pred_check
      _
    $region11: #{tpu_custom_call.1} parent=1 // pred_check_branch
      %36 = sbr.rel (0) target = $region13
    $region12: #{tpu_custom_call.1} parent=1 // pred_region
      _
    $region13: #{tpu_custom_call.1} parent=1 // pred_fallthru
      _
    // Predicated region
    $region14: #{tpu_custom_call.1} parent=1 // pred_check
      _
    $region15: #{tpu_custom_call.1} parent=1 // pred_check_branch
      %38 = sbr.rel (0) target = $region17
    $region16: #{tpu_custom_call.1} parent=1 // pred_region
      %39 = dma.done [#allocation3], 8192
    $region17: #{tpu_custom_call.1} parent=1 // pred_fallthru
      _
    // Predicated region
    $region18: #{tpu_custom_call.1} parent=1 // pred_check
      _
    $region19: #{tpu_custom_call.1} parent=1 // pred_check_branch
      %41 = sbr.rel (0) target = $region21
    $region20: #{tpu_custom_call.1} parent=1 // pred_region
      %42 = dma.done [#allocation6], 2048
    $region21: #{tpu_custom_call.1} parent=1 // pred_fallthru
      _
    %v43 = vld [vmem:[#allocation2] sm:$0xff]
    %v44 = vld [vmem:[#allocation2 + $0x8] sm:$0xff]
    %v45 = vld [vmem:[#allocation2 + $0x10] sm:$0xff]
    %v46 = vld [vmem:[#allocation2 + $0x18] sm:$0xff]
    %v47 = vld [vmem:[#allocation2 + $0x20] sm:$0xff]
    %v48 = vld [vmem:[#allocation2 + $0x28] sm:$0xff]
    %v49 = vld [vmem:[#allocation2 + $0x30] sm:$0xff]
    %v50 = vld [vmem:[#allocation2 + $0x38] sm:$0xff]
    %v51 = vld [vmem:[#allocation2 + $0x40] sm:$0xff]
    %v52 = vld [vmem:[#allocation2 + $0x48] sm:$0xff]
    %v53 = vld [vmem:[#allocation2 + $0x50] sm:$0xff]
    %v54 = vld [vmem:[#allocation2 + $0x58] sm:$0xff]
    %v55 = vld [vmem:[#allocation2 + $0x60] sm:$0xff]
    %v56 = vld [vmem:[#allocation2 + $0x68] sm:$0xff]
    %v57 = vld [vmem:[#allocation2 + $0x70] sm:$0xff]
    %v58 = vld [vmem:[#allocation2 + $0x78] sm:$0xff]
    %v59 = vld [vmem:[#allocation2 + $0x80] sm:$0xff]
    %v60 = vld [vmem:[#allocation2 + $0x88] sm:$0xff]
    %v61 = vld [vmem:[#allocation2 + $0x90] sm:$0xff]
    %v62 = vld [vmem:[#allocation2 + $0x98] sm:$0xff]
    %v63 = vld [vmem:[#allocation2 + $0xa0] sm:$0xff]
    %v64 = vld [vmem:[#allocation2 + $0xa8] sm:$0xff]
    %v65 = vld [vmem:[#allocation2 + $0xb0] sm:$0xff]
    %v66 = vld [vmem:[#allocation2 + $0xb8] sm:$0xff]
    %v67 = vld [vmem:[#allocation2 + $0xc0] sm:$0xff]
    %v68 = vld [vmem:[#allocation2 + $0xc8] sm:$0xff]
    %v69 = vld [vmem:[#allocation2 + $0xd0] sm:$0xff]
    %v70 = vld [vmem:[#allocation2 + $0xd8] sm:$0xff]
    %v71 = vld [vmem:[#allocation2 + $0xe0] sm:$0xff]
    %v72 = vld [vmem:[#allocation2 + $0xe8] sm:$0xff]
    %v73 = vld [vmem:[#allocation2 + $0xf0] sm:$0xff]
    %v74 = vld [vmem:[#allocation2 + $0xf8] sm:$0xff]
    %v75 = vld [vmem:[#allocation2 + $0x100] sm:$0xff]
    %v76 = vld [vmem:[#allocation2 + $0x108] sm:$0xff]
    %v77 = vld [vmem:[#allocation2 + $0x110] sm:$0xff]
    %v78 = vld [vmem:[#allocation2 + $0x118] sm:$0xff]
    %v79 = vld [vmem:[#allocation2 + $0x120] sm:$0xff]
    %v80 = vld [vmem:[#allocation2 + $0x128] sm:$0xff]
    %v81 = vld [vmem:[#allocation2 + $0x130] sm:$0xff]
    %v82 = vld [vmem:[#allocation2 + $0x138] sm:$0xff]
    %v83 = vld [vmem:[#allocation2 + $0x140] sm:$0xff]
    %v84 = vld [vmem:[#allocation2 + $0x148] sm:$0xff]
    %v85 = vld [vmem:[#allocation2 + $0x150] sm:$0xff]
    %v86 = vld [vmem:[#allocation2 + $0x158] sm:$0xff]
    %v87 = vld [vmem:[#allocation2 + $0x160] sm:$0xff]
    %v88 = vld [vmem:[#allocation2 + $0x168] sm:$0xff]
    %v89 = vld [vmem:[#allocation2 + $0x170] sm:$0xff]
    %v90 = vld [vmem:[#allocation2 + $0x178] sm:$0xff]
    %v91 = vld [vmem:[#allocation2 + $0x180] sm:$0xff]
    %v92 = vld [vmem:[#allocation2 + $0x188] sm:$0xff]
    %v93 = vld [vmem:[#allocation2 + $0x190] sm:$0xff]
    %v94 = vld [vmem:[#allocation2 + $0x198] sm:$0xff]
    %v95 = vld [vmem:[#allocation2 + $0x1a0] sm:$0xff]
    %v96 = vld [vmem:[#allocation2 + $0x1a8] sm:$0xff]
    %v97 = vld [vmem:[#allocation2 + $0x1b0] sm:$0xff]
    %v98 = vld [vmem:[#allocation2 + $0x1b8] sm:$0xff]
    %v99 = vld [vmem:[#allocation2 + $0x1c0] sm:$0xff]
    %v100 = vld [vmem:[#allocation2 + $0x1c8] sm:$0xff]
    %v101 = vld [vmem:[#allocation2 + $0x1d0] sm:$0xff]
    %v102 = vld [vmem:[#allocation2 + $0x1d8] sm:$0xff]
    %v103 = vld [vmem:[#allocation2 + $0x1e0] sm:$0xff]
    %v104 = vld [vmem:[#allocation2 + $0x1e8] sm:$0xff]
    %v105 = vld [vmem:[#allocation2 + $0x1f0] sm:$0xff]
    %v106 = vld [vmem:[#allocation2 + $0x1f8] sm:$0xff]
    %v107 = vld [vmem:[#allocation5] sm:$0xff]
    %v108 = vld [vmem:[#allocation5 + $0x8] sm:$0xff]
    %v109 = vld [vmem:[#allocation5 + $0x10] sm:$0xff]
    %v110 = vld [vmem:[#allocation5 + $0x18] sm:$0xff]
    %v111 = vld [vmem:[#allocation5 + $0x20] sm:$0xff]
    %v112 = vld [vmem:[#allocation5 + $0x28] sm:$0xff]
    %v113 = vld [vmem:[#allocation5 + $0x30] sm:$0xff]
    %v114 = vld [vmem:[#allocation5 + $0x38] sm:$0xff]
    %v115 = vld [vmem:[#allocation5 + $0x40] sm:$0xff]
    %v116 = vld [vmem:[#allocation5 + $0x48] sm:$0xff]
    %v117 = vld [vmem:[#allocation5 + $0x50] sm:$0xff]
    %v118 = vld [vmem:[#allocation5 + $0x58] sm:$0xff]
    %v119 = vld [vmem:[#allocation5 + $0x60] sm:$0xff]
    %v120 = vld [vmem:[#allocation5 + $0x68] sm:$0xff]
    %v121 = vld [vmem:[#allocation5 + $0x70] sm:$0xff]
    %v122 = vld [vmem:[#allocation5 + $0x78] sm:$0xff]
    %v123 = vld [vmem:[%s2] sm:$0x1]
    %v125 = vlaneseq
    %v126 = vshrl.u32 %v125, 7
    %v127 = vsub.s32 0, %v126
    %v128 = vrot.slane %v123, %v127
    %130 = vmatprep.subr.mxu0 0.0
    %131 = vmatpush1.msra.mxu0 %v107
    %132 = vmatprep.subr.mxu0 0.0
    %133 = vmatpush1.msra.mxu0 %v108
    %134 = vmatprep.subr.mxu0 0.0
    %135 = vmatpush1.msra.mxu0 %v109
    %136 = vmatprep.subr.mxu0 0.0
    %137 = vmatpush1.msra.mxu0 %v110
    %138 = vmatprep.subr.mxu0 0.0
    %139 = vmatpush1.msra.mxu0 %v111
    %140 = vmatprep.subr.mxu0 0.0
    %141 = vmatpush1.msra.mxu0 %v112
    %142 = vmatprep.subr.mxu0 0.0
    %143 = vmatpush1.msra.mxu0 %v113
    %144 = vmatprep.subr.mxu0 0.0
    %145 = vmatpush1.msra.mxu0 %v114
    %146 = vmatprep.subr.mxu0 0.0
    %147 = vmatpush1.msra.mxu0 %v115
    %148 = vmatprep.subr.mxu0 0.0
    %149 = vmatpush1.msra.mxu0 %v116
    %150 = vmatprep.subr.mxu0 0.0
    %151 = vmatpush1.msra.mxu0 %v117
    %152 = vmatprep.subr.mxu0 0.0
    %153 = vmatpush1.msra.mxu0 %v118
    %154 = vmatprep.subr.mxu0 0.0
    %155 = vmatpush1.msra.mxu0 %v119
    %156 = vmatprep.subr.mxu0 0.0
    %157 = vmatpush1.msra.mxu0 %v120
    %158 = vmatprep.subr.mxu0 0.0
    %159 = vmatpush1.msra.mxu0 %v121
    %160 = vmatprep.subr.mxu0 0.0
    %161 = vmatpush1.msra.mxu0 %v122
    %162 = vmatprep.subr.mxu0 0.0
    %163 = vmatpush1.msra.mxu0 0.0
    %164 = vmatprep.subr.mxu0 0.0
    %165 = vmatpush1.msra.mxu0 0.0
    %166 = vmatprep.subr.mxu0 0.0
    %167 = vmatpush1.msra.mxu0 0.0
    %168 = vmatprep.subr.mxu0 0.0
    %169 = vmatpush1.msra.mxu0 0.0
    %170 = vmatprep.subr.mxu0 0.0
    %171 = vmatpush1.msra.mxu0 0.0
    %172 = vmatprep.subr.mxu0 0.0
    %173 = vmatpush1.msra.mxu0 0.0
    %174 = vmatprep.subr.mxu0 0.0
    %175 = vmatpush1.msra.mxu0 0.0
    %176 = vmatprep.subr.mxu0 0.0
    %177 = vmatpush1.msra.mxu0 0.0
    %178 = vmatprep.subr.mxu0 0.0
    %179 = vmatpush1.msra.mxu0 0.0
    %180 = vmatprep.subr.mxu0 0.0
    %181 = vmatpush1.msra.mxu0 0.0
    %182 = vmatprep.subr.mxu0 0.0
    %183 = vmatpush1.msra.mxu0 0.0
    %184 = vmatprep.subr.mxu0 0.0
    %185 = vmatpush1.msra.mxu0 0.0
    %186 = vmatprep.subr.mxu0 0.0
    %187 = vmatpush1.msra.mxu0 0.0
    %188 = vmatprep.subr.mxu0 0.0
    %189 = vmatpush1.msra.mxu0 0.0
    %190 = vmatprep.subr.mxu0 0.0
    %191 = vmatpush1.msra.mxu0 0.0
    %192 = vmatprep.subr.mxu0 0.0
    %193 = vmatpush1.msra.mxu0 0.0
    %194 = vmatprep.mubr.f32.mxu0 0.0
    %195 = vmatmul.mubr.f32.gmra.mrb[0].mxu0 %v43
    %v196 = vpop.f32.mrb[0].mxu0
    %v197 = vadd.f32 %v128, %v196
    %v198 = vpop.f32.mrb[0].mxu0
    %199 = vmatprep.mubr.f32.mxu0 0.0
    %200 = vmatmul.mubr.f32.gmra.mrb[0].mxu0 %v44
    %v201 = vpop.f32.mrb[0].mxu0
    %v202 = vadd.f32 %v128, %v201
    %v203 = vpop.f32.mrb[0].mxu0
    %204 = vmatprep.mubr.f32.mxu0 0.0
    %205 = vmatmul.mubr.f32.gmra.mrb[0].mxu0 %v45
    %v206 = vpop.f32.mrb[0].mxu0
    %v207 = vadd.f32 %v128, %v206
    %v208 = vpop.f32.mrb[0].mxu0
    %209 = vmatprep.mubr.f32.mxu0 0.0
    %210 = vmatmul.mubr.f32.gmra.mrb[0].mxu0 %v46
    %v211 = vpop.f32.mrb[0].mxu0
    %v212 = vadd.f32 %v128, %v211
    %v213 = vpop.f32.mrb[0].mxu0
    %214 = vmatprep.mubr.f32.mxu0 0.0
    %215 = vmatmul.mubr.f32.gmra.mrb[0].mxu0 %v47
    %v216 = vpop.f32.mrb[0].mxu0
    %v217 = vadd.f32 %v128, %v216
    %v218 = vpop.f32.mrb[0].mxu0
    %219 = vmatprep.mubr.f32.mxu0 0.0
    %220 = vmatmul.mubr.f32.gmra.mrb[0].mxu0 %v48
    %v221 = vpop.f32.mrb[0].mxu0
    %v222 = vadd.f32 %v128, %v221
    %v223 = vpop.f32.mrb[0].mxu0
    %224 = vmatprep.mubr.f32.mxu0 0.0
    %225 = vmatmul.mubr.f32.gmra.mrb[0].mxu0 %v49
    %v226 = vpop.f32.mrb[0].mxu0
    %v227 = vadd.f32 %v128, %v226
    %v228 = vpop.f32.mrb[0].mxu0
    %229 = vmatprep.mubr.f32.mxu0 0.0
    %230 = vmatmul.mubr.f32.gmra.mrb[0].mxu0 %v50
    %v231 = vpop.f32.mrb[0].mxu0
    %v232 = vadd.f32 %v128, %v231
    %v233 = vpop.f32.mrb[0].mxu0
    %234 = vmatprep.mubr.f32.mxu0 0.0
    %235 = vmatmul.mubr.f32.gmra.mrb[0].mxu0 %v51
    %v236 = vpop.f32.mrb[0].mxu0
    %v237 = vadd.f32 %v128, %v236
    %v238 = vpop.f32.mrb[0].mxu0
    %239 = vmatprep.mubr.f32.mxu0 0.0
    %240 = vmatmul.mubr.f32.gmra.mrb[0].mxu0 %v52
    %v241 = vpop.f32.mrb[0].mxu0
    %v242 = vadd.f32 %v128, %v241
    %v243 = vpop.f32.mrb[0].mxu0
    %244 = vmatprep.mubr.f32.mxu0 0.0
    %245 = vmatmul.mubr.f32.gmra.mrb[0].mxu0 %v53
    %v246 = vpop.f32.mrb[0].mxu0
    %v247 = vadd.f32 %v128, %v246
    %v248 = vpop.f32.mrb[0].mxu0
    %249 = vmatprep.mubr.f32.mxu0 0.0
    %250 = vmatmul.mubr.f32.gmra.mrb[0].mxu0 %v54
    %v251 = vpop.f32.mrb[0].mxu0
    %v252 = vadd.f32 %v128, %v251
    %v253 = vpop.f32.mrb[0].mxu0
    %254 = vmatprep.mubr.f32.mxu0 0.0
    %255 = vmatmul.mubr.f32.gmra.mrb[0].mxu0 %v55
    %v256 = vpop.f32.mrb[0].mxu0
    %v257 = vadd.f32 %v128, %v256
    %v258 = vpop.f32.mrb[0].mxu0
    %259 = vmatprep.mubr.f32.mxu0 0.0
    %260 = vmatmul.mubr.f32.gmra.mrb[0].mxu0 %v56
    %v261 = vpop.f32.mrb[0].mxu0
    %v262 = vadd.f32 %v128, %v261
    %v263 = vpop.f32.mrb[0].mxu0
    %264 = vmatprep.mubr.f32.mxu0 0.0
    %265 = vmatmul.mubr.f32.gmra.mrb[0].mxu0 %v57
    %v266 = vpop.f32.mrb[0].mxu0
    %v267 = vadd.f32 %v128, %v266
    %v268 = vpop.f32.mrb[0].mxu0
    %269 = vmatprep.mubr.f32.mxu0 0.0
    %270 = vmatmul.mubr.f32.gmra.mrb[0].mxu0 %v58
    %v271 = vpop.f32.mrb[0].mxu0
    %v272 = vadd.f32 %v128, %v271
    %v273 = vpop.f32.mrb[0].mxu0
    %274 = vmatprep.mubr.f32.mxu0 0.0
    %275 = vmatmul.mubr.f32.gmra.mrb[0].mxu0 %v59
    %v276 = vpop.f32.mrb[0].mxu0
    %v277 = vadd.f32 %v128, %v276
    %v278 = vpop.f32.mrb[0].mxu0
    %279 = vmatprep.mubr.f32.mxu0 0.0
    %280 = vmatmul.mubr.f32.gmra.mrb[0].mxu0 %v60
    %v281 = vpop.f32.mrb[0].mxu0
    %v282 = vadd.f32 %v128, %v281
    %v283 = vpop.f32.mrb[0].mxu0
    %284 = vmatprep.mubr.f32.mxu0 0.0
    %285 = vmatmul.mubr.f32.gmra.mrb[0].mxu0 %v61
    %v286 = vpop.f32.mrb[0].mxu0
    %v287 = vadd.f32 %v128, %v286
    %v288 = vpop.f32.mrb[0].mxu0
    %289 = vmatprep.mubr.f32.mxu0 0.0
    %290 = vmatmul.mubr.f32.gmra.mrb[0].mxu0 %v62
    %v291 = vpop.f32.mrb[0].mxu0
    %v292 = vadd.f32 %v128, %v291
    %v293 = vpop.f32.mrb[0].mxu0
    %294 = vmatprep.mubr.f32.mxu0 0.0
    %295 = vmatmul.mubr.f32.gmra.mrb[0].mxu0 %v63
    %v296 = vpop.f32.mrb[0].mxu0
    %v297 = vadd.f32 %v128, %v296
    %v298 = vpop.f32.mrb[0].mxu0
    %299 = vmatprep.mubr.f32.mxu0 0.0
    %300 = vmatmul.mubr.f32.gmra.mrb[0].mxu0 %v64
    %v301 = vpop.f32.mrb[0].mxu0
    %v302 = vadd.f32 %v128, %v301
    %v303 = vpop.f32.mrb[0].mxu0
    %304 = vmatprep.mubr.f32.mxu0 0.0
    %305 = vmatmul.mubr.f32.gmra.mrb[0].mxu0 %v65
    %v306 = vpop.f32.mrb[0].mxu0
    %v307 = vadd.f32 %v128, %v306
    %v308 = vpop.f32.mrb[0].mxu0
    %309 = vmatprep.mubr.f32.mxu0 0.0
    %310 = vmatmul.mubr.f32.gmra.mrb[0].mxu0 %v66
    %v311 = vpop.f32.mrb[0].mxu0
    %v312 = vadd.f32 %v128, %v311
    %v313 = vpop.f32.mrb[0].mxu0
    %314 = vmatprep.mubr.f32.mxu0 0.0
    %315 = vmatmul.mubr.f32.gmra.mrb[0].mxu0 %v67
    %v316 = vpop.f32.mrb[0].mxu0
    %v317 = vadd.f32 %v128, %v316
    %v318 = vpop.f32.mrb[0].mxu0
    %319 = vmatprep.mubr.f32.mxu0 0.0
    %320 = vmatmul.mubr.f32.gmra.mrb[0].mxu0 %v68
    %v321 = vpop.f32.mrb[0].mxu0
    %v322 = vadd.f32 %v128, %v321
    %v323 = vpop.f32.mrb[0].mxu0
    %324 = vmatprep.mubr.f32.mxu0 0.0
    %325 = vmatmul.mubr.f32.gmra.mrb[0].mxu0 %v69
    %v326 = vpop.f32.mrb[0].mxu0
    %v327 = vadd.f32 %v128, %v326
    %v328 = vpop.f32.mrb[0].mxu0
    %329 = vmatprep.mubr.f32.mxu0 0.0
    %330 = vmatmul.mubr.f32.gmra.mrb[0].mxu0 %v70
    %v331 = vpop.f32.mrb[0].mxu0
    %v332 = vadd.f32 %v128, %v331
    %v333 = vpop.f32.mrb[0].mxu0
    %334 = vmatprep.mubr.f32.mxu0 0.0
    %335 = vmatmul.mubr.f32.gmra.mrb[0].mxu0 %v71
    %v336 = vpop.f32.mrb[0].mxu0
    %v337 = vadd.f32 %v128, %v336
    %v338 = vpop.f32.mrb[0].mxu0
    %339 = vmatprep.mubr.f32.mxu0 0.0
    %340 = vmatmul.mubr.f32.gmra.mrb[0].mxu0 %v72
    %v341 = vpop.f32.mrb[0].mxu0
    %v342 = vadd.f32 %v128, %v341
    %v343 = vpop.f32.mrb[0].mxu0
    %344 = vmatprep.mubr.f32.mxu0 0.0
    %345 = vmatmul.mubr.f32.gmra.mrb[0].mxu0 %v73
    %v346 = vpop.f32.mrb[0].mxu0
    %v347 = vadd.f32 %v128, %v346
    %v348 = vpop.f32.mrb[0].mxu0
    %349 = vmatprep.mubr.f32.mxu0 0.0
    %350 = vmatmul.mubr.f32.gmra.mrb[0].mxu0 %v74
    %v351 = vpop.f32.mrb[0].mxu0
    %v352 = vadd.f32 %v128, %v351
    %v353 = vpop.f32.mrb[0].mxu0
    %354 = vmatprep.mubr.f32.mxu0 0.0
    %355 = vmatmul.mubr.f32.gmra.mrb[0].mxu0 %v75
    %v356 = vpop.f32.mrb[0].mxu0
    %v357 = vadd.f32 %v128, %v356
    %v358 = vpop.f32.mrb[0].mxu0
    %359 = vmatprep.mubr.f32.mxu0 0.0
    %360 = vmatmul.mubr.f32.gmra.mrb[0].mxu0 %v76
    %v361 = vpop.f32.mrb[0].mxu0
    %v362 = vadd.f32 %v128, %v361
    %v363 = vpop.f32.mrb[0].mxu0
    %364 = vmatprep.mubr.f32.mxu0 0.0
    %365 = vmatmul.mubr.f32.gmra.mrb[0].mxu0 %v77
    %v366 = vpop.f32.mrb[0].mxu0
    %v367 = vadd.f32 %v128, %v366
    %v368 = vpop.f32.mrb[0].mxu0
    %369 = vmatprep.mubr.f32.mxu0 0.0
    %370 = vmatmul.mubr.f32.gmra.mrb[0].mxu0 %v78
    %v371 = vpop.f32.mrb[0].mxu0
    %v372 = vadd.f32 %v128, %v371
    %v373 = vpop.f32.mrb[0].mxu0
    %374 = vmatprep.mubr.f32.mxu0 0.0
    %375 = vmatmul.mubr.f32.gmra.mrb[0].mxu0 %v79
    %v376 = vpop.f32.mrb[0].mxu0
    %v377 = vadd.f32 %v128, %v376
    %v378 = vpop.f32.mrb[0].mxu0
    %379 = vmatprep.mubr.f32.mxu0 0.0
    %380 = vmatmul.mubr.f32.gmra.mrb[0].mxu0 %v80
    %v381 = vpop.f32.mrb[0].mxu0
    %v382 = vadd.f32 %v128, %v381
    %v383 = vpop.f32.mrb[0].mxu0
    %384 = vmatprep.mubr.f32.mxu0 0.0
    %385 = vmatmul.mubr.f32.gmra.mrb[0].mxu0 %v81
    %v386 = vpop.f32.mrb[0].mxu0
    %v387 = vadd.f32 %v128, %v386
    %v388 = vpop.f32.mrb[0].mxu0
    %389 = vmatprep.mubr.f32.mxu0 0.0
    %390 = vmatmul.mubr.f32.gmra.mrb[0].mxu0 %v82
    %v391 = vpop.f32.mrb[0].mxu0
    %v392 = vadd.f32 %v128, %v391
    %v393 = vpop.f32.mrb[0].mxu0
    %394 = vmatprep.mubr.f32.mxu0 0.0
    %395 = vmatmul.mubr.f32.gmra.mrb[0].mxu0 %v83
    %v396 = vpop.f32.mrb[0].mxu0
    %v397 = vadd.f32 %v128, %v396
    %v398 = vpop.f32.mrb[0].mxu0
    %399 = vmatprep.mubr.f32.mxu0 0.0
    %400 = vmatmul.mubr.f32.gmra.mrb[0].mxu0 %v84
    %v401 = vpop.f32.mrb[0].mxu0
    %v402 = vadd.f32 %v128, %v401
    %v403 = vpop.f32.mrb[0].mxu0
    %404 = vmatprep.mubr.f32.mxu0 0.0
    %405 = vmatmul.mubr.f32.gmra.mrb[0].mxu0 %v85
    %v406 = vpop.f32.mrb[0].mxu0
    %v407 = vadd.f32 %v128, %v406
    %v408 = vpop.f32.mrb[0].mxu0
    %409 = vmatprep.mubr.f32.mxu0 0.0
    %410 = vmatmul.mubr.f32.gmra.mrb[0].mxu0 %v86
    %v411 = vpop.f32.mrb[0].mxu0
    %v412 = vadd.f32 %v128, %v411
    %v413 = vpop.f32.mrb[0].mxu0
    %414 = vmatprep.mubr.f32.mxu0 0.0
    %415 = vmatmul.mubr.f32.gmra.mrb[0].mxu0 %v87
    %v416 = vpop.f32.mrb[0].mxu0
    %v417 = vadd.f32 %v128, %v416
    %v418 = vpop.f32.mrb[0].mxu0
    %419 = vmatprep.mubr.f32.mxu0 0.0
    %420 = vmatmul.mubr.f32.gmra.mrb[0].mxu0 %v88
    %v421 = vpop.f32.mrb[0].mxu0
    %v422 = vadd.f32 %v128, %v421
    %v423 = vpop.f32.mrb[0].mxu0
    %424 = vmatprep.mubr.f32.mxu0 0.0
    %425 = vmatmul.mubr.f32.gmra.mrb[0].mxu0 %v89
    %v426 = vpop.f32.mrb[0].mxu0
    %v427 = vadd.f32 %v128, %v426
    %v428 = vpop.f32.mrb[0].mxu0
    %429 = vmatprep.mubr.f32.mxu0 0.0
    %430 = vmatmul.mubr.f32.gmra.mrb[0].mxu0 %v90
    %v431 = vpop.f32.mrb[0].mxu0
    %v432 = vadd.f32 %v128, %v431
    %v433 = vpop.f32.mrb[0].mxu0
    %434 = vmatprep.mubr.f32.mxu0 0.0
    %435 = vmatmul.mubr.f32.gmra.mrb[0].mxu0 %v91
    %v436 = vpop.f32.mrb[0].mxu0
    %v437 = vadd.f32 %v128, %v436
    %v438 = vpop.f32.mrb[0].mxu0
    %439 = vmatprep.mubr.f32.mxu0 0.0
    %440 = vmatmul.mubr.f32.gmra.mrb[0].mxu0 %v92
    %v441 = vpop.f32.mrb[0].mxu0
    %v442 = vadd.f32 %v128, %v441
    %v443 = vpop.f32.mrb[0].mxu0
    %444 = vmatprep.mubr.f32.mxu0 0.0
    %445 = vmatmul.mubr.f32.gmra.mrb[0].mxu0 %v93
    %v446 = vpop.f32.mrb[0].mxu0
    %v447 = vadd.f32 %v128, %v446
    %v448 = vpop.f32.mrb[0].mxu0
    %449 = vmatprep.mubr.f32.mxu0 0.0
    %450 = vmatmul.mubr.f32.gmra.mrb[0].mxu0 %v94
    %v451 = vpop.f32.mrb[0].mxu0
    %v452 = vadd.f32 %v128, %v451
    %v453 = vpop.f32.mrb[0].mxu0
    %454 = vmatprep.mubr.f32.mxu0 0.0
    %455 = vmatmul.mubr.f32.gmra.mrb[0].mxu0 %v95
    %v456 = vpop.f32.mrb[0].mxu0
    %v457 = vadd.f32 %v128, %v456
    %v458 = vpop.f32.mrb[0].mxu0
    %459 = vmatprep.mubr.f32.mxu0 0.0
    %460 = vmatmul.mubr.f32.gmra.mrb[0].mxu0 %v96
    %v461 = vpop.f32.mrb[0].mxu0
    %v462 = vadd.f32 %v128, %v461
    %v463 = vpop.f32.mrb[0].mxu0
    %464 = vmatprep.mubr.f32.mxu0 0.0
    %465 = vmatmul.mubr.f32.gmra.mrb[0].mxu0 %v97
    %v466 = vpop.f32.mrb[0].mxu0
    %v467 = vadd.f32 %v128, %v466
    %v468 = vpop.f32.mrb[0].mxu0
    %469 = vmatprep.mubr.f32.mxu0 0.0
    %470 = vmatmul.mubr.f32.gmra.mrb[0].mxu0 %v98
    %v471 = vpop.f32.mrb[0].mxu0
    %v472 = vadd.f32 %v128, %v471
    %v473 = vpop.f32.mrb[0].mxu0
    %474 = vmatprep.mubr.f32.mxu0 0.0
    %475 = vmatmul.mubr.f32.gmra.mrb[0].mxu0 %v99
    %v476 = vpop.f32.mrb[0].mxu0
    %v477 = vadd.f32 %v128, %v476
    %v478 = vpop.f32.mrb[0].mxu0
    %479 = vmatprep.mubr.f32.mxu0 0.0
    %480 = vmatmul.mubr.f32.gmra.mrb[0].mxu0 %v100
    %v481 = vpop.f32.mrb[0].mxu0
    %v482 = vadd.f32 %v128, %v481
    %v483 = vpop.f32.mrb[0].mxu0
    %484 = vmatprep.mubr.f32.mxu0 0.0
    %485 = vmatmul.mubr.f32.gmra.mrb[0].mxu0 %v101
    %v486 = vpop.f32.mrb[0].mxu0
    %v487 = vadd.f32 %v128, %v486
    %v488 = vpop.f32.mrb[0].mxu0
    %489 = vmatprep.mubr.f32.mxu0 0.0
    %490 = vmatmul.mubr.f32.gmra.mrb[0].mxu0 %v102
    %v491 = vpop.f32.mrb[0].mxu0
    %v492 = vadd.f32 %v128, %v491
    %v493 = vpop.f32.mrb[0].mxu0
    %494 = vmatprep.mubr.f32.mxu0 0.0
    %495 = vmatmul.mubr.f32.gmra.mrb[0].mxu0 %v103
    %v496 = vpop.f32.mrb[0].mxu0
    %v497 = vadd.f32 %v128, %v496
    %v498 = vpop.f32.mrb[0].mxu0
    %499 = vmatprep.mubr.f32.mxu0 0.0
    %500 = vmatmul.mubr.f32.gmra.mrb[0].mxu0 %v104
    %v501 = vpop.f32.mrb[0].mxu0
    %v502 = vadd.f32 %v128, %v501
    %v503 = vpop.f32.mrb[0].mxu0
    %504 = vmatprep.mubr.f32.mxu0 0.0
    %505 = vmatmul.mubr.f32.gmra.mrb[0].mxu0 %v105
    %v506 = vpop.f32.mrb[0].mxu0
    %v507 = vadd.f32 %v128, %v506
    %v508 = vpop.f32.mrb[0].mxu0
    %509 = vmatprep.mubr.f32.mxu0 0.0
    %510 = vmatmul.mubr.f32.gmra.mrb[0].mxu0 %v106
    %v511 = vpop.f32.mrb[0].mxu0
    %v512 = vadd.f32 %v128, %v511
    %v513 = vpop.f32.mrb[0].mxu0
    %514 = vdwg.mxu0
    %vm515 = vcmp.gt.f32.partialorder %v197, 0.0
    %vm516 = vcmp.gt.f32.partialorder %v202, 0.0
    %vm517 = vcmp.gt.f32.partialorder %v207, 0.0
    %vm518 = vcmp.gt.f32.partialorder %v212, 0.0
    %vm519 = vcmp.gt.f32.partialorder %v217, 0.0
    %vm520 = vcmp.gt.f32.partialorder %v222, 0.0
    %vm521 = vcmp.gt.f32.partialorder %v227, 0.0
    %vm522 = vcmp.gt.f32.partialorder %v232, 0.0
    %vm523 = vcmp.gt.f32.partialorder %v237, 0.0
    %vm524 = vcmp.gt.f32.partialorder %v242, 0.0
    %vm525 = vcmp.gt.f32.partialorder %v247, 0.0
    %vm526 = vcmp.gt.f32.partialorder %v252, 0.0
    %vm527 = vcmp.gt.f32.partialorder %v257, 0.0
    %vm528 = vcmp.gt.f32.partialorder %v262, 0.0
    %vm529 = vcmp.gt.f32.partialorder %v267, 0.0
    %vm530 = vcmp.gt.f32.partialorder %v272, 0.0
    %vm531 = vcmp.gt.f32.partialorder %v277, 0.0
    %vm532 = vcmp.gt.f32.partialorder %v282, 0.0
    %vm533 = vcmp.gt.f32.partialorder %v287, 0.0
    %vm534 = vcmp.gt.f32.partialorder %v292, 0.0
    %vm535 = vcmp.gt.f32.partialorder %v297, 0.0
    %vm536 = vcmp.gt.f32.partialorder %v302, 0.0
    %vm537 = vcmp.gt.f32.partialorder %v307, 0.0
    %vm538 = vcmp.gt.f32.partialorder %v312, 0.0
    %vm539 = vcmp.gt.f32.partialorder %v317, 0.0
    %vm540 = vcmp.gt.f32.partialorder %v322, 0.0
    %vm541 = vcmp.gt.f32.partialorder %v327, 0.0
    %vm542 = vcmp.gt.f32.partialorder %v332, 0.0
    %vm543 = vcmp.gt.f32.partialorder %v337, 0.0
    %vm544 = vcmp.gt.f32.partialorder %v342, 0.0
    %vm545 = vcmp.gt.f32.partialorder %v347, 0.0
    %vm546 = vcmp.gt.f32.partialorder %v352, 0.0
    %vm547 = vcmp.gt.f32.partialorder %v357, 0.0
    %vm548 = vcmp.gt.f32.partialorder %v362, 0.0
    %vm549 = vcmp.gt.f32.partialorder %v367, 0.0
    %vm550 = vcmp.gt.f32.partialorder %v372, 0.0
    %vm551 = vcmp.gt.f32.partialorder %v377, 0.0
    %vm552 = vcmp.gt.f32.partialorder %v382, 0.0
    %vm553 = vcmp.gt.f32.partialorder %v387, 0.0
    %vm554 = vcmp.gt.f32.partialorder %v392, 0.0
    %vm555 = vcmp.gt.f32.partialorder %v397, 0.0
    %vm556 = vcmp.gt.f32.partialorder %v402, 0.0
    %vm557 = vcmp.gt.f32.partialorder %v407, 0.0
    %vm558 = vcmp.gt.f32.partialorder %v412, 0.0
    %vm559 = vcmp.gt.f32.partialorder %v417, 0.0
    %vm560 = vcmp.gt.f32.partialorder %v422, 0.0
    %vm561 = vcmp.gt.f32.partialorder %v427, 0.0
    %vm562 = vcmp.gt.f32.partialorder %v432, 0.0
    %vm563 = vcmp.gt.f32.partialorder %v437, 0.0
    %vm564 = vcmp.gt.f32.partialorder %v442, 0.0
    %vm565 = vcmp.gt.f32.partialorder %v447, 0.0
    %vm566 = vcmp.gt.f32.partialorder %v452, 0.0
    %vm567 = vcmp.gt.f32.partialorder %v457, 0.0
    %vm568 = vcmp.gt.f32.partialorder %v462, 0.0
    %vm569 = vcmp.gt.f32.partialorder %v467, 0.0
    %vm570 = vcmp.gt.f32.partialorder %v472, 0.0
    %vm571 = vcmp.gt.f32.partialorder %v477, 0.0
    %vm572 = vcmp.gt.f32.partialorder %v482, 0.0
    %vm573 = vcmp.gt.f32.partialorder %v487, 0.0
    %vm574 = vcmp.gt.f32.partialorder %v492, 0.0
    %vm575 = vcmp.gt.f32.partialorder %v497, 0.0
    %vm576 = vcmp.gt.f32.partialorder %v502, 0.0
    %vm577 = vcmp.gt.f32.partialorder %v507, 0.0
    %vm578 = vcmp.gt.f32.partialorder %v512, 0.0
    %v579 = vmul.f32 %v197, 0.01
    %v580 = vmul.f32 %v202, 0.01
    %v581 = vmul.f32 %v207, 0.01
    %v582 = vmul.f32 %v212, 0.01
    %v583 = vmul.f32 %v217, 0.01
    %v584 = vmul.f32 %v222, 0.01
    %v585 = vmul.f32 %v227, 0.01
    %v586 = vmul.f32 %v232, 0.01
    %v587 = vmul.f32 %v237, 0.01
    %v588 = vmul.f32 %v242, 0.01
    %v589 = vmul.f32 %v247, 0.01
    %v590 = vmul.f32 %v252, 0.01
    %v591 = vmul.f32 %v257, 0.01
    %v592 = vmul.f32 %v262, 0.01
    %v593 = vmul.f32 %v267, 0.01
    %v594 = vmul.f32 %v272, 0.01
    %v595 = vmul.f32 %v277, 0.01
    %v596 = vmul.f32 %v282, 0.01
    %v597 = vmul.f32 %v287, 0.01
    %v598 = vmul.f32 %v292, 0.01
    %v599 = vmul.f32 %v297, 0.01
    %v600 = vmul.f32 %v302, 0.01
    %v601 = vmul.f32 %v307, 0.01
    %v602 = vmul.f32 %v312, 0.01
    %v603 = vmul.f32 %v317, 0.01
    %v604 = vmul.f32 %v322, 0.01
    %v605 = vmul.f32 %v327, 0.01
    %v606 = vmul.f32 %v332, 0.01
    %v607 = vmul.f32 %v337, 0.01
    %v608 = vmul.f32 %v342, 0.01
    %v609 = vmul.f32 %v347, 0.01
    %v610 = vmul.f32 %v352, 0.01
    %v611 = vmul.f32 %v357, 0.01
    %v612 = vmul.f32 %v362, 0.01
    %v613 = vmul.f32 %v367, 0.01
    %v614 = vmul.f32 %v372, 0.01
    %v615 = vmul.f32 %v377, 0.01
    %v616 = vmul.f32 %v382, 0.01
    %v617 = vmul.f32 %v387, 0.01
    %v618 = vmul.f32 %v392, 0.01
    %v619 = vmul.f32 %v397, 0.01
    %v620 = vmul.f32 %v402, 0.01
    %v621 = vmul.f32 %v407, 0.01
    %v622 = vmul.f32 %v412, 0.01
    %v623 = vmul.f32 %v417, 0.01
    %v624 = vmul.f32 %v422, 0.01
    %v625 = vmul.f32 %v427, 0.01
    %v626 = vmul.f32 %v432, 0.01
    %v627 = vmul.f32 %v437, 0.01
    %v628 = vmul.f32 %v442, 0.01
    %v629 = vmul.f32 %v447, 0.01
    %v630 = vmul.f32 %v452, 0.01
    %v631 = vmul.f32 %v457, 0.01
    %v632 = vmul.f32 %v462, 0.01
    %v633 = vmul.f32 %v467, 0.01
    %v634 = vmul.f32 %v472, 0.01
    %v635 = vmul.f32 %v477, 0.01
    %v636 = vmul.f32 %v482, 0.01
    %v637 = vmul.f32 %v487, 0.01
    %v638 = vmul.f32 %v492, 0.01
    %v639 = vmul.f32 %v497, 0.01
    %v640 = vmul.f32 %v502, 0.01
    %v641 = vmul.f32 %v507, 0.01
    %v642 = vmul.f32 %v512, 0.01
    %v643 = vsel %vm515, %v197, %v579
    %v644 = vsel %vm516, %v202, %v580
    %v645 = vsel %vm517, %v207, %v581
    %v646 = vsel %vm518, %v212, %v582
    %v647 = vsel %vm519, %v217, %v583
    %v648 = vsel %vm520, %v222, %v584
    %v649 = vsel %vm521, %v227, %v585
    %v650 = vsel %vm522, %v232, %v586
    %v651 = vsel %vm523, %v237, %v587
    %v652 = vsel %vm524, %v242, %v588
    %v653 = vsel %vm525, %v247, %v589
    %v654 = vsel %vm526, %v252, %v590
    %v655 = vsel %vm527, %v257, %v591
    %v656 = vsel %vm528, %v262, %v592
    %v657 = vsel %vm529, %v267, %v593
    %v658 = vsel %vm530, %v272, %v594
    %v659 = vsel %vm531, %v277, %v595
    %v660 = vsel %vm532, %v282, %v596
    %v661 = vsel %vm533, %v287, %v597
    %v662 = vsel %vm534, %v292, %v598
    %v663 = vsel %vm535, %v297, %v599
    %v664 = vsel %vm536, %v302, %v600
    %v665 = vsel %vm537, %v307, %v601
    %v666 = vsel %vm538, %v312, %v602
    %v667 = vsel %vm539, %v317, %v603
    %v668 = vsel %vm540, %v322, %v604
    %v669 = vsel %vm541, %v327, %v605
    %v670 = vsel %vm542, %v332, %v606
    %v671 = vsel %vm543, %v337, %v607
    %v672 = vsel %vm544, %v342, %v608
    %v673 = vsel %vm545, %v347, %v609
    %v674 = vsel %vm546, %v352, %v610
    %v675 = vsel %vm547, %v357, %v611
    %v676 = vsel %vm548, %v362, %v612
    %v677 = vsel %vm549, %v367, %v613
    %v678 = vsel %vm550, %v372, %v614
    %v679 = vsel %vm551, %v377, %v615
    %v680 = vsel %vm552, %v382, %v616
    %v681 = vsel %vm553, %v387, %v617
    %v682 = vsel %vm554, %v392, %v618
    %v683 = vsel %vm555, %v397, %v619
    %v684 = vsel %vm556, %v402, %v620
    %v685 = vsel %vm557, %v407, %v621
    %v686 = vsel %vm558, %v412, %v622
    %v687 = vsel %vm559, %v417, %v623
    %v688 = vsel %vm560, %v422, %v624
    %v689 = vsel %vm561, %v427, %v625
    %v690 = vsel %vm562, %v432, %v626
    %v691 = vsel %vm563, %v437, %v627
    %v692 = vsel %vm564, %v442, %v628
    %v693 = vsel %vm565, %v447, %v629
    %v694 = vsel %vm566, %v452, %v630
    %v695 = vsel %vm567, %v457, %v631
    %v696 = vsel %vm568, %v462, %v632
    %v697 = vsel %vm569, %v467, %v633
    %v698 = vsel %vm570, %v472, %v634
    %v699 = vsel %vm571, %v477, %v635
    %v700 = vsel %vm572, %v482, %v636
    %v701 = vsel %vm573, %v487, %v637
    %v702 = vsel %vm574, %v492, %v638
    %v703 = vsel %vm575, %v497, %v639
    %v704 = vsel %vm576, %v502, %v640
    %v705 = vsel %vm577, %v507, %v641
    %v706 = vsel %vm578, %v512, %v642
    %707 = vst [vmem:[#allocation7] sm:$0xff] %v643
    %708 = vst [vmem:[#allocation7 + $0x8] sm:$0xff] %v644
    %709 = vst [vmem:[#allocation7 + $0x10] sm:$0xff] %v645
    %710 = vst [vmem:[#allocation7 + $0x18] sm:$0xff] %v646
    %711 = vst [vmem:[#allocation7 + $0x20] sm:$0xff] %v647
    %712 = vst [vmem:[#allocation7 + $0x28] sm:$0xff] %v648
    %713 = vst [vmem:[#allocation7 + $0x30] sm:$0xff] %v649
    %714 = vst [vmem:[#allocation7 + $0x38] sm:$0xff] %v650
    %715 = vst [vmem:[#allocation7 + $0x40] sm:$0xff] %v651
    %716 = vst [vmem:[#allocation7 + $0x48] sm:$0xff] %v652
    %717 = vst [vmem:[#allocation7 + $0x50] sm:$0xff] %v653
    %718 = vst [vmem:[#allocation7 + $0x58] sm:$0xff] %v654
    %719 = vst [vmem:[#allocation7 + $0x60] sm:$0xff] %v655
    %720 = vst [vmem:[#allocation7 + $0x68] sm:$0xff] %v656
    %721 = vst [vmem:[#allocation7 + $0x70] sm:$0xff] %v657
    %722 = vst [vmem:[#allocation7 + $0x78] sm:$0xff] %v658
    %723 = vst [vmem:[#allocation7 + $0x80] sm:$0xff] %v659
    %724 = vst [vmem:[#allocation7 + $0x88] sm:$0xff] %v660
    %725 = vst [vmem:[#allocation7 + $0x90] sm:$0xff] %v661
    %726 = vst [vmem:[#allocation7 + $0x98] sm:$0xff] %v662
    %727 = vst [vmem:[#allocation7 + $0xa0] sm:$0xff] %v663
    %728 = vst [vmem:[#allocation7 + $0xa8] sm:$0xff] %v664
    %729 = vst [vmem:[#allocation7 + $0xb0] sm:$0xff] %v665
    %730 = vst [vmem:[#allocation7 + $0xb8] sm:$0xff] %v666
    %731 = vst [vmem:[#allocation7 + $0xc0] sm:$0xff] %v667
    %732 = vst [vmem:[#allocation7 + $0xc8] sm:$0xff] %v668
    %733 = vst [vmem:[#allocation7 + $0xd0] sm:$0xff] %v669
    %734 = vst [vmem:[#allocation7 + $0xd8] sm:$0xff] %v670
    %735 = vst [vmem:[#allocation7 + $0xe0] sm:$0xff] %v671
    %736 = vst [vmem:[#allocation7 + $0xe8] sm:$0xff] %v672
    %737 = vst [vmem:[#allocation7 + $0xf0] sm:$0xff] %v673
    %738 = vst [vmem:[#allocation7 + $0xf8] sm:$0xff] %v674
    %739 = vst [vmem:[#allocation7 + $0x100] sm:$0xff] %v675
    %740 = vst [vmem:[#allocation7 + $0x108] sm:$0xff] %v676
    %741 = vst [vmem:[#allocation7 + $0x110] sm:$0xff] %v677
    %742 = vst [vmem:[#allocation7 + $0x118] sm:$0xff] %v678
    %743 = vst [vmem:[#allocation7 + $0x120] sm:$0xff] %v679
    %744 = vst [vmem:[#allocation7 + $0x128] sm:$0xff] %v680
    %745 = vst [vmem:[#allocation7 + $0x130] sm:$0xff] %v681
    %746 = vst [vmem:[#allocation7 + $0x138] sm:$0xff] %v682
    %747 = vst [vmem:[#allocation7 + $0x140] sm:$0xff] %v683
    %748 = vst [vmem:[#allocation7 + $0x148] sm:$0xff] %v684
    %749 = vst [vmem:[#allocation7 + $0x150] sm:$0xff] %v685
    %750 = vst [vmem:[#allocation7 + $0x158] sm:$0xff] %v686
    %751 = vst [vmem:[#allocation7 + $0x160] sm:$0xff] %v687
    %752 = vst [vmem:[#allocation7 + $0x168] sm:$0xff] %v688
    %753 = vst [vmem:[#allocation7 + $0x170] sm:$0xff] %v689
    %754 = vst [vmem:[#allocation7 + $0x178] sm:$0xff] %v690
    %755 = vst [vmem:[#allocation7 + $0x180] sm:$0xff] %v691
    %756 = vst [vmem:[#allocation7 + $0x188] sm:$0xff] %v692
    %757 = vst [vmem:[#allocation7 + $0x190] sm:$0xff] %v693
    %758 = vst [vmem:[#allocation7 + $0x198] sm:$0xff] %v694
    %759 = vst [vmem:[#allocation7 + $0x1a0] sm:$0xff] %v695
    %760 = vst [vmem:[#allocation7 + $0x1a8] sm:$0xff] %v696
    %761 = vst [vmem:[#allocation7 + $0x1b0] sm:$0xff] %v697
    %762 = vst [vmem:[#allocation7 + $0x1b8] sm:$0xff] %v698
    %763 = vst [vmem:[#allocation7 + $0x1c0] sm:$0xff] %v699
    %764 = vst [vmem:[#allocation7 + $0x1c8] sm:$0xff] %v700
    %765 = vst [vmem:[#allocation7 + $0x1d0] sm:$0xff] %v701
    %766 = vst [vmem:[#allocation7 + $0x1d8] sm:$0xff] %v702
    %767 = vst [vmem:[#allocation7 + $0x1e0] sm:$0xff] %v703
    %768 = vst [vmem:[#allocation7 + $0x1e8] sm:$0xff] %v704
    %769 = vst [vmem:[#allocation7 + $0x1f0] sm:$0xff] %v705
    %770 = vst [vmem:[#allocation7 + $0x1f8] sm:$0xff] %v706
    // Predicated region
    $region22: #{tpu_custom_call.1} parent=1 // pred_check
      _
    $region23: #{tpu_custom_call.1} parent=1 // pred_check_branch
      %772 = sbr.rel (0) target = $region25
    $region24: #{tpu_custom_call.1} parent=1 // pred_region
      %s774 = ssub.s32 8192, 8192
      %775 = vsyncadd [#allocation4], %s774
      %s776 = sshll.u32 [#allocation7], 4
      %s777 = int_to_ptr.vmem [resolvable:$true] %s776
      %782 = dma.vmem_to_hbm [thread:$0]  %s777, 8192, %s3, [#allocation4], 128, 128, 8
    $region25: #{tpu_custom_call.1} parent=1 // pred_fallthru
      _
    // Predicated region
    $region26: #{tpu_custom_call.1} parent=1 // pred_check
      _
    $region27: #{tpu_custom_call.1} parent=1 // pred_check_branch
      %784 = sbr.rel (0) target = $region29
    $region28: #{tpu_custom_call.1} parent=1 // pred_region
      %785 = dma.done [#allocation4], 8192
    $region29: #{tpu_custom_call.1} parent=1 // pred_fallthru
      _
    %786 = vsyncpa [#allocation3], 1
    %787 = vsyncpa [#allocation6], 1
    %788 = vsyncpa [#allocation4], 1

</llo_original>
